<compile_context>
chip_gen: v5e
topology: v5e:2x2
jax: 0.10.0
libtpu: 0.0.40
codegen_flags: <defaults>
</compile_context>

<pallas_src>
import functools

import jax
import jax.numpy as jnp
from jax import lax
from jax.experimental import pallas as pl
from jax.experimental.pallas import tpu as pltpu


# ----------------------------------------------------------------------------
# Kernel: one (batch element, row tile) per grid step.
#   x_ref    : (C, Lh)   halo'd input slab: image rows [jT-1, jT+T], flattened on lanes,
#                        zero rows outside the image, lane-padded to Lh (mult. of 128)
#   wdw_ref  : (C, 9)    depthwise 3x3 weights, column k = tap (dy,dx) = divmod(k,3)
#   w1_ref   : (9C, C)   stacked AFG 1x1 weights, row = k*C + c_out   (mxu_dtype)
#   beff_ref : (9C, 1)   per-batch folded bias:  W1 @ (b_dw + channel_attention) + b1
#   o_ref    : (C, T*W)  output rows [jT, jT+T), flattened on lanes (lane-dense)
# ----------------------------------------------------------------------------
def dyconv_kernel(x_ref, wdw_ref, w1_ref, beff_ref, o_ref, *,
                  width, rows, channels, mxu_dtype):
    C = channels
    TW = rows * width
    Lh = x_ref.shape[-1]

    x = x_ref[...]                                    # (C, Lh) f32
    wdw = wdw_ref[...]                                # (C, 9)  f32

    # Column-border masks, generated in-kernel (no HBM mask stream).  Vertical borders
    # need no mask: the halo rows outside the image are zeros.
    idx = lax.broadcasted_iota(jnp.int32, (1, TW), 1)
    if width & (width - 1) == 0:
        col = jnp.bitwise_and(idx, width - 1)         # cheap power-of-two path
    else:
        col = jnp.remainder(idx, width)
    left_ok = (col >= 1).astype(x.dtype)              # valid when the tap reads column cc-1
    right_ok = (col <= width - 2).astype(x.dtype)     # valid when the tap reads column cc+1

    def tap(k):
        # tap k=(dy,dx): value at output flat position q is x_halo[q + dy*W + dx - 1].
        # Roll wrap-around / lane-padding reads only hit column-masked corner positions.
        dy, dx = divmod(k, 3)
        off = dy * width + (dx - 1)
        if off == 0:
            t = x[:, :TW]
        else:
            t = pltpu.roll(x, (-off) % Lh, axis=1)[:, :TW]
        if dx == 0:
            t = t * left_ok
        elif dx == 2:
            t = t * right_ok
        return t                                      # (C, TW)

    # --- SEKG depthwise 3x3 conv (its bias + channel attention are folded into beff) ----
    sa = wdw[:, 0:1] * tap(0)
    for k in range(1, 9):
        sa = sa + wdw[:, k:k + 1] * tap(k)

    # --- AFG 1x1 conv: ONE stacked (9C, C) @ (C, TW) MXU dot, bf16/f32 operands,
    #     f32 accumulation.  (At real C=64 this is the right MXU shape.) ----------------
    filt = jnp.dot(w1_ref[...], sa.astype(mxu_dtype),
                   preferred_element_type=jnp.float32) + beff_ref[...]    # (9C, TW)

    # --- DyConv: per-pixel 3x3 dynamic filtering.  Taps are recomputed (XLU rolls are
    #     near-free) so the 9 (C, TW) slabs are not live across the matmul. ------------
    acc = tap(0) * filt[0:C]
    for k in range(1, 9):
        acc = acc + tap(k) * filt[k * C:(k + 1) * C]

    o_ref[...] = acc.astype(o_ref.dtype)


# ----------------------------------------------------------------------------
# Tile-size heuristic: largest row tile with lane-dense output (T*W % 128 == 0),
# >= 512 lanes if possible, and a per-step working set inside a v7x-safe budget.
# ----------------------------------------------------------------------------
def _pick_row_tile(h, w, c):
    budget = 12 * (1 << 20)              # dominant live bytes per step (v7x: 64 MiB phys)
    per_row = 24 * c * w * 4             # x+halo, s_map, 9C filt, out, transients (f32)
    divs = [d for d in range(1, h + 1) if h % d == 0]
    cands = [d for d in divs if (d * w) % 128 == 0 or d == h]
    good = [d for d in cands if d * w >= 512 and d * per_row <= budget]
    if good:
        return max(good)
    fits = [d for d in cands if d * per_row <= budget]
    if fits:
        return max(fits)
    return min(cands)


# ----------------------------------------------------------------------------
# Wrapper: parameter folding / re-layout + pallas_call.
# ----------------------------------------------------------------------------
@functools.partial(jax.jit, static_argnames=("row_tile", "mxu_dtype"))
def dyconv_pallas(x, params, row_tile=None, mxu_dtype=jnp.bfloat16):
    b, c, h, w = x.shape
    if row_tile is None:
        row_tile = _pick_row_tile(h, w, c)
    assert h % row_tile == 0, "row_tile must divide H"
    assert (row_tile * w) % 128 == 0 or row_tile == h, "output tile must stay lane-dense"
    K = 9
    n_tiles = h // row_tile
    tw = row_tile * w
    lh = (row_tile + 2) * w
    lh_pad = max(128, -(-lh // 128) * 128)
    L = h * w
    f32 = jnp.float32

    xf = x.astype(f32)

    # --- per-(batch, row-tile) halo'd input slabs (zero rows at the image borders) ------
    # TODO(synk): a production variant would fetch the 2 halo rows with a manual DMA
    # (pl.ANY + make_async_copy) or pl.Element offsets instead of duplicating them in HBM.
    xp = jnp.pad(xf, ((0, 0), (0, 0), (1, 1), (0, 0)))                    # (b, c, h+2, w)
    x_tiles = jnp.stack(
        [xp[:, :, j * row_tile: j * row_tile + row_tile + 2, :] for j in range(n_tiles)],
        axis=1).reshape(b, n_tiles, c, lh)
    if lh_pad != lh:
        x_tiles = jnp.pad(x_tiles, ((0, 0), (0, 0), (0, 0), (0, lh_pad - lh)))

    # --- parameter re-layout + folding (tiny, f32, done once outside the kernel) --------
    wdw = params["w_dw"].reshape(c, K).astype(f32)                        # (C, 9)
    # 1x1 conv: PyTorch out-channel oc = c_out*9 + k  ->  stacked row k*C + c_out.
    w1s_f32 = (params["w1"][:, :, 0, 0].reshape(c, K, c)
               .transpose(1, 0, 2).reshape(K * c, c)).astype(f32)         # (9C, C)
    b1s = params["b1"].reshape(c, K).T.reshape(K * c).astype(f32)         # (9C,)

    # Channel attention (global avg-pool + Conv1d(1,1,3,pad=1) over channels): per-batch
    # (C,)-sized pre-pass, then folded with the depthwise bias THROUGH the 1x1 conv.
    ymean = jnp.mean(xf, axis=(2, 3))                                     # (b, C)
    yp = jnp.pad(ymean, ((0, 0), (1, 1)))
    wca = params["w_ca"][0, 0].astype(f32)                                # (3,)
    ca = (wca[0] * yp[:, 0:c] + wca[1] * yp[:, 1:c + 1] + wca[2] * yp[:, 2:c + 2]
          + params["b_ca"][0])                                            # (b, C)
    sekg_bias = ca + params["b_dw"][None, :].astype(f32)                  # (b, C)
    beff = (sekg_bias @ w1s_f32.T + b1s[None, :]).reshape(b, K * c, 1)    # (b, 9C, 1)

    w1s = w1s_f32.astype(mxu_dtype)

    kernel = functools.partial(dyconv_kernel, width=w, rows=row_tile,
                               channels=c, mxu_dtype=mxu_dtype)

    # Explicit VMEM budget (review: v7x 64 MiB is the binding constraint).
    vmem_est = (2 * 4 * c * lh_pad + 2 * 4 * c * tw            # x / out (double-buffered)
                + 4 * K * c * tw                               # filt intermediate
                + 8 * 4 * c * tw                               # sa / taps / acc transients
                + 2 * (4 * c * 128 + w1s.dtype.itemsize * K * c * c + 4 * K * c * 128)
                + (2 << 20))
    vmem_limit = int(min(max(vmem_est, 16 << 20), 64 << 20))

    out_flat = pl.pallas_call(
        kernel,
        out_shape=jax.ShapeDtypeStruct((b, c, L), x.dtype),
        grid_spec=pltpu.PrefetchScalarGridSpec(
            num_scalar_prefetch=0,
            grid=(b, n_tiles),
            in_specs=[
                pl.BlockSpec((pl.Squeezed(), pl.Squeezed(), c, lh_pad),
                             lambda i, j: (i, j, 0, 0)),                  # halo'd x slab
                pl.BlockSpec((c, K), lambda i, j: (0, 0)),                # depthwise weights
                pl.BlockSpec((K * c, c), lambda i, j: (0, 0)),            # stacked 1x1 weights
                pl.BlockSpec((pl.Squeezed(), K * c, 1),
                             lambda i, j: (i, 0, 0)),                     # per-batch folded bias
            ],
            out_specs=pl.BlockSpec((pl.Squeezed(), c, tw), lambda i, j: (i, 0, j)),
        ),
        compiler_params=pltpu.CompilerParams(
            dimension_semantics=("parallel", "parallel"),
            vmem_limit_bytes=vmem_limit),
    )(x_tiles, wdw, w1s, beff)

    return out_flat.reshape(b, c, h, w)


# ----------------------------------------------------------------------------
# Pure-JAX reference (mirrors the PyTorch module exactly) for validation.
# ----------------------------------------------------------------------------
def dyconv_ref(x, params):
    b, c, h, w = x.shape
    dn2 = ("NCHW", "OIHW", "NCHW")
    hi = lax.Precision.HIGHEST

    sa = lax.conv_general_dilated(
        x, params["w_dw"], (1, 1), "SAME", dimension_numbers=dn2,
        feature_group_count=c, precision=hi) + params["b_dw"][None, :, None, None]
    y = jnp.mean(x, axis=(2, 3))
    ca = lax.conv_general_dilated(
        y[:, None, :], params["w_ca"], (1,), "SAME",
        dimension_numbers=("NCH", "OIH", "NCH"),
        precision=hi)[:, 0, :] + params["b_ca"][0]
    sekg = sa + ca[:, :, None, None]
    f = lax.conv_general_dilated(
        sekg, params["w1"], (1, 1), "SAME", dimension_numbers=dn2,
        precision=hi) + params["b1"][None, :, None, None]
    filt = f.reshape(b, c, 9, h, w)
    xp = jnp.pad(x, ((0, 0), (0, 0), (1, 1), (1, 1)))
    patches = jnp.stack(
        [xp[:, :, dy:dy + h, dx:dx + w] for dy in range(3) for dx in range(3)],
        axis=2)
    return (patches * filt).sum(2)


if __name__ == "__main__":
    B, C, H, W = 2, 8, 16, 16
    KSZ = 3

    key = jax.random.PRNGKey(0)
    kx, k1, k2, k3, k4, k5, k6 = jax.random.split(key, 7)

    x = jax.random.normal(kx, (B, C, H, W), jnp.float32)
    params = {
        # SEKG.conv_sa : depthwise Conv2d(C, C, 3, pad=1, groups=C)
        "w_dw": 0.1 * jax.random.normal(k1, (C, 1, 3, 3), jnp.float32),
        "b_dw": 0.1 * jax.random.normal(k2, (C,), jnp.float32),
        # SEKG.conv_ca : Conv1d(1, 1, 3, pad=1)
        "w_ca": 0.1 * jax.random.normal(k3, (1, 1, KSZ), jnp.float32),
        "b_ca": 0.1 * jax.random.normal(k4, (1,), jnp.float32),
        # AFG.conv : Conv2d(C, C*9, 1)
        "w1": 0.1 * jax.random.normal(k5, (C * KSZ * KSZ, C, 1, 1), jnp.float32),
        "b1": 0.1 * jax.random.normal(k6, (C * KSZ * KSZ,), jnp.float32),
    }

    ref = jax.block_until_ready(dyconv_ref(x, params))

    # 1) Strict check: f32 MXU operands, forced 2-way row tiling (exercises halo/tiling path).
    out_f32 = jax.block_until_ready(
        dyconv_pallas(x, params, row_tile=8, mxu_dtype=jnp.float32))
    assert out_f32.shape == (B, C, H, W)
    assert jnp.allclose(out_f32, ref, rtol=1e-3, atol=1e-3), (
        float(jnp.max(jnp.abs(out_f32 - ref))))

    # 2) Default path: bf16 MXU operands (per perf review), auto tile size.
    #    Tolerance widened to what bf16 operand rounding implies; accumulation stays f32.
    out_bf16 = jax.block_until_ready(dyconv_pallas(x, params))
    assert out_bf16.shape == (B, C, H, W)
    assert jnp.allclose(out_bf16, ref, rtol=2e-2, atol=2e-2), (
        float(jnp.max(jnp.abs(out_bf16 - ref))))

    print("KERNEL_OK")
</pallas_src>

<mosaic_0001>
module attributes {stable_mosaic.version = 11 : i64} {
  func.func @dyconv_kernel(%arg0: i32, %arg1: i32, %arg2: memref<1x1x8x256xf32, #tpu.memory_space<vmem>>, %arg3: memref<8x9xf32, #tpu.memory_space<vmem>>, %arg4: memref<72x8xf32, #tpu.memory_space<vmem>>, %arg5: memref<1x72x1xf32, #tpu.memory_space<vmem>>, %arg6: memref<1x8x128xf32, #tpu.memory_space<vmem>>) attributes {dimension_semantics = [#tpu.dimension_semantics<parallel>, #tpu.dimension_semantics<parallel>], iteration_bounds = array<i64: 2, 2>, scalar_prefetch = 0 : i64, scratch_operands = 0 : i64, tpu.core_type = #tpu.core_type<tc>, window_params = [{transform_indices = @transform_0, window_bounds = array<i64: 1, 1, 8, 256>}, {pipeline_mode = #tpu.pipeline_mode<synchronous>, transform_indices = @transform_1, window_bounds = array<i64: 8, 9>}, {pipeline_mode = #tpu.pipeline_mode<synchronous>, transform_indices = @transform_2, window_bounds = array<i64: 72, 8>}, {transform_indices = @transform_3, window_bounds = array<i64: 1, 72, 1>}, {transform_indices = @transform_4, window_bounds = array<i64: 1, 8, 128>}]} {
    %c0 = arith.constant 0 : index
    %c0_0 = arith.constant 0 : index
    %c0_1 = arith.constant 0 : index
    %c0_2 = arith.constant 0 : index
    %0 = vector.load %arg2[%c0, %c0_0, %c0_1, %c0_2] : memref<1x1x8x256xf32, #tpu.memory_space<vmem>>, vector<1x1x8x256xf32>
    %1 = vector.shape_cast %0 : vector<1x1x8x256xf32> to vector<8x256xf32>
    %c0_3 = arith.constant 0 : index
    %c0_4 = arith.constant 0 : index
    %2 = vector.load %arg3[%c0_3, %c0_4] : memref<8x9xf32, #tpu.memory_space<vmem>>, vector<8x9xf32>
    %3 = tpu.iota {dimensions = array<i32: 1>} : vector<1x128xi32>
    %c15_i32 = arith.constant 15 : i32
    %4 = vector.broadcast %c15_i32 : i32 to vector<1x128xi32>
    %5 = arith.andi %3, %4 : vector<1x128xi32>
    %c1_i32 = arith.constant 1 : i32
    %6 = vector.broadcast %c1_i32 : i32 to vector<1x128xi32>
    %7 = arith.cmpi sge, %5, %6 : vector<1x128xi32>
    %8 = arith.extui %7 : vector<1x128xi1> to vector<1x128xi32>
    %9 = arith.sitofp %8 : vector<1x128xi32> to vector<1x128xf32>
    %c14_i32 = arith.constant 14 : i32
    %10 = vector.broadcast %c14_i32 : i32 to vector<1x128xi32>
    %11 = arith.cmpi sle, %5, %10 : vector<1x128xi32>
    %12 = arith.extui %11 : vector<1x128xi1> to vector<1x128xi32>
    %13 = arith.sitofp %12 : vector<1x128xi32> to vector<1x128xf32>
    %14 = vector.extract_strided_slice %2 {offsets = [0, 0], sizes = [8, 1], strides = [1, 1]} : vector<8x9xf32> to vector<8x1xf32>
    %c1_i32_5 = arith.constant 1 : i32
    %15 = tpu.dynamic_rotate %1 by %c1_i32_5 dim 1 : vector<8x256xf32>, i32 -> vector<8x256xf32>
    %16 = vector.extract_strided_slice %15 {offsets = [0, 0], sizes = [8, 128], strides = [1, 1]} : vector<8x256xf32> to vector<8x128xf32>
    %17 = vector.broadcast %9 : vector<1x128xf32> to vector<8x128xf32>
    %18 = arith.mulf %16, %17 : vector<8x128xf32>
    %19 = vector.broadcast %14 : vector<8x1xf32> to vector<8x128xf32>
    %20 = arith.mulf %19, %18 : vector<8x128xf32>
    %21 = vector.extract_strided_slice %2 {offsets = [0, 1], sizes = [8, 1], strides = [1, 1]} : vector<8x9xf32> to vector<8x1xf32>
    %22 = vector.extract_strided_slice %1 {offsets = [0, 0], sizes = [8, 128], strides = [1, 1]} : vector<8x256xf32> to vector<8x128xf32>
    %23 = vector.broadcast %21 : vector<8x1xf32> to vector<8x128xf32>
    %24 = arith.mulf %23, %22 : vector<8x128xf32>
    %25 = arith.addf %20, %24 : vector<8x128xf32>
    %26 = vector.extract_strided_slice %2 {offsets = [0, 2], sizes = [8, 1], strides = [1, 1]} : vector<8x9xf32> to vector<8x1xf32>
    %c255_i32 = arith.constant 255 : i32
    %27 = tpu.dynamic_rotate %1 by %c255_i32 dim 1 : vector<8x256xf32>, i32 -> vector<8x256xf32>
    %28 = vector.extract_strided_slice %27 {offsets = [0, 0], sizes = [8, 128], strides = [1, 1]} : vector<8x256xf32> to vector<8x128xf32>
    %29 = vector.broadcast %13 : vector<1x128xf32> to vector<8x128xf32>
    %30 = arith.mulf %28, %29 : vector<8x128xf32>
    %31 = vector.broadcast %26 : vector<8x1xf32> to vector<8x128xf32>
    %32 = arith.mulf %31, %30 : vector<8x128xf32>
    %33 = arith.addf %25, %32 : vector<8x128xf32>
    %34 = vector.extract_strided_slice %2 {offsets = [0, 3], sizes = [8, 1], strides = [1, 1]} : vector<8x9xf32> to vector<8x1xf32>
    %c241_i32 = arith.constant 241 : i32
    %35 = tpu.dynamic_rotate %1 by %c241_i32 dim 1 : vector<8x256xf32>, i32 -> vector<8x256xf32>
    %36 = vector.extract_strided_slice %35 {offsets = [0, 0], sizes = [8, 128], strides = [1, 1]} : vector<8x256xf32> to vector<8x128xf32>
    %37 = vector.broadcast %9 : vector<1x128xf32> to vector<8x128xf32>
    %38 = arith.mulf %36, %37 : vector<8x128xf32>
    %39 = vector.broadcast %34 : vector<8x1xf32> to vector<8x128xf32>
    %40 = arith.mulf %39, %38 : vector<8x128xf32>
    %41 = arith.addf %33, %40 : vector<8x128xf32>
    %42 = vector.extract_strided_slice %2 {offsets = [0, 4], sizes = [8, 1], strides = [1, 1]} : vector<8x9xf32> to vector<8x1xf32>
    %c240_i32 = arith.constant 240 : i32
    %43 = tpu.dynamic_rotate %1 by %c240_i32 dim 1 : vector<8x256xf32>, i32 -> vector<8x256xf32>
    %44 = vector.extract_strided_slice %43 {offsets = [0, 0], sizes = [8, 128], strides = [1, 1]} : vector<8x256xf32> to vector<8x128xf32>
    %45 = vector.broadcast %42 : vector<8x1xf32> to vector<8x128xf32>
    %46 = arith.mulf %45, %44 : vector<8x128xf32>
    %47 = arith.addf %41, %46 : vector<8x128xf32>
    %48 = vector.extract_strided_slice %2 {offsets = [0, 5], sizes = [8, 1], strides = [1, 1]} : vector<8x9xf32> to vector<8x1xf32>
    %c239_i32 = arith.constant 239 : i32
    %49 = tpu.dynamic_rotate %1 by %c239_i32 dim 1 : vector<8x256xf32>, i32 -> vector<8x256xf32>
    %50 = vector.extract_strided_slice %49 {offsets = [0, 0], sizes = [8, 128], strides = [1, 1]} : vector<8x256xf32> to vector<8x128xf32>
    %51 = vector.broadcast %13 : vector<1x128xf32> to vector<8x128xf32>
    %52 = arith.mulf %50, %51 : vector<8x128xf32>
    %53 = vector.broadcast %48 : vector<8x1xf32> to vector<8x128xf32>
    %54 = arith.mulf %53, %52 : vector<8x128xf32>
    %55 = arith.addf %47, %54 : vector<8x128xf32>
    %56 = vector.extract_strided_slice %2 {offsets = [0, 6], sizes = [8, 1], strides = [1, 1]} : vector<8x9xf32> to vector<8x1xf32>
    %c225_i32 = arith.constant 225 : i32
    %57 = tpu.dynamic_rotate %1 by %c225_i32 dim 1 : vector<8x256xf32>, i32 -> vector<8x256xf32>
    %58 = vector.extract_strided_slice %57 {offsets = [0, 0], sizes = [8, 128], strides = [1, 1]} : vector<8x256xf32> to vector<8x128xf32>
    %59 = vector.broadcast %9 : vector<1x128xf32> to vector<8x128xf32>
    %60 = arith.mulf %58, %59 : vector<8x128xf32>
    %61 = vector.broadcast %56 : vector<8x1xf32> to vector<8x128xf32>
    %62 = arith.mulf %61, %60 : vector<8x128xf32>
    %63 = arith.addf %55, %62 : vector<8x128xf32>
    %64 = vector.extract_strided_slice %2 {offsets = [0, 7], sizes = [8, 1], strides = [1, 1]} : vector<8x9xf32> to vector<8x1xf32>
    %c224_i32 = arith.constant 224 : i32
    %65 = tpu.dynamic_rotate %1 by %c224_i32 dim 1 : vector<8x256xf32>, i32 -> vector<8x256xf32>
    %66 = vector.extract_strided_slice %65 {offsets = [0, 0], sizes = [8, 128], strides = [1, 1]} : vector<8x256xf32> to vector<8x128xf32>
    %67 = vector.broadcast %64 : vector<8x1xf32> to vector<8x128xf32>
    %68 = arith.mulf %67, %66 : vector<8x128xf32>
    %69 = arith.addf %63, %68 : vector<8x128xf32>
    %70 = vector.extract_strided_slice %2 {offsets = [0, 8], sizes = [8, 1], strides = [1, 1]} : vector<8x9xf32> to vector<8x1xf32>
    %c223_i32 = arith.constant 223 : i32
    %71 = tpu.dynamic_rotate %1 by %c223_i32 dim 1 : vector<8x256xf32>, i32 -> vector<8x256xf32>
    %72 = vector.extract_strided_slice %71 {offsets = [0, 0], sizes = [8, 128], strides = [1, 1]} : vector<8x256xf32> to vector<8x128xf32>
    %73 = vector.broadcast %13 : vector<1x128xf32> to vector<8x128xf32>
    %74 = arith.mulf %72, %73 : vector<8x128xf32>
    %75 = vector.broadcast %70 : vector<8x1xf32> to vector<8x128xf32>
    %76 = arith.mulf %75, %74 : vector<8x128xf32>
    %77 = arith.addf %69, %76 : vector<8x128xf32>
    %c0_6 = arith.constant 0 : index
    %c0_7 = arith.constant 0 : index
    %78 = vector.load %arg4[%c0_6, %c0_7] : memref<72x8xf32, #tpu.memory_space<vmem>>, vector<72x8xf32>
    %cst = arith.constant dense<0.000000e+00> : vector<72x128xf32>
    %79 = tpu.matmul %78, %77, %cst {dimension_numbers = #tpu.dot_dimension_numbers<[1], [0], [0], [1], [0, 0, 1, 1], [], []>} : vector<72x8xf32>, vector<8x128xf32>, vector<72x128xf32> -> vector<72x128xf32>
    %c0_8 = arith.constant 0 : index
    %c0_9 = arith.constant 0 : index
    %c0_10 = arith.constant 0 : index
    %80 = vector.load %arg5[%c0_8, %c0_9, %c0_10] : memref<1x72x1xf32, #tpu.memory_space<vmem>>, vector<1x72x1xf32>
    %81 = vector.shape_cast %80 : vector<1x72x1xf32> to vector<72x1xf32>
    %82 = vector.broadcast %81 : vector<72x1xf32> to vector<72x128xf32>
    %83 = arith.addf %79, %82 : vector<72x128xf32>
    %c1_i32_11 = arith.constant 1 : i32
    %84 = tpu.dynamic_rotate %1 by %c1_i32_11 dim 1 : vector<8x256xf32>, i32 -> vector<8x256xf32>
    %85 = vector.extract_strided_slice %84 {offsets = [0, 0], sizes = [8, 128], strides = [1, 1]} : vector<8x256xf32> to vector<8x128xf32>
    %86 = vector.broadcast %9 : vector<1x128xf32> to vector<8x128xf32>
    %87 = arith.mulf %85, %86 : vector<8x128xf32>
    %88 = vector.extract_strided_slice %83 {offsets = [0, 0], sizes = [8, 128], strides = [1, 1]} : vector<72x128xf32> to vector<8x128xf32>
    %89 = arith.mulf %87, %88 : vector<8x128xf32>
    %90 = vector.extract_strided_slice %1 {offsets = [0, 0], sizes = [8, 128], strides = [1, 1]} : vector<8x256xf32> to vector<8x128xf32>
    %91 = vector.extract_strided_slice %83 {offsets = [8, 0], sizes = [8, 128], strides = [1, 1]} : vector<72x128xf32> to vector<8x128xf32>
    %92 = arith.mulf %90, %91 : vector<8x128xf32>
    %93 = arith.addf %89, %92 : vector<8x128xf32>
    %c255_i32_12 = arith.constant 255 : i32
    %94 = tpu.dynamic_rotate %1 by %c255_i32_12 dim 1 : vector<8x256xf32>, i32 -> vector<8x256xf32>
    %95 = vector.extract_strided_slice %94 {offsets = [0, 0], sizes = [8, 128], strides = [1, 1]} : vector<8x256xf32> to vector<8x128xf32>
    %96 = vector.broadcast %13 : vector<1x128xf32> to vector<8x128xf32>
    %97 = arith.mulf %95, %96 : vector<8x128xf32>
    %98 = vector.extract_strided_slice %83 {offsets = [16, 0], sizes = [8, 128], strides = [1, 1]} : vector<72x128xf32> to vector<8x128xf32>
    %99 = arith.mulf %97, %98 : vector<8x128xf32>
    %100 = arith.addf %93, %99 : vector<8x128xf32>
    %c241_i32_13 = arith.constant 241 : i32
    %101 = tpu.dynamic_rotate %1 by %c241_i32_13 dim 1 : vector<8x256xf32>, i32 -> vector<8x256xf32>
    %102 = vector.extract_strided_slice %101 {offsets = [0, 0], sizes = [8, 128], strides = [1, 1]} : vector<8x256xf32> to vector<8x128xf32>
    %103 = vector.broadcast %9 : vector<1x128xf32> to vector<8x128xf32>
    %104 = arith.mulf %102, %103 : vector<8x128xf32>
    %105 = vector.extract_strided_slice %83 {offsets = [24, 0], sizes = [8, 128], strides = [1, 1]} : vector<72x128xf32> to vector<8x128xf32>
    %106 = arith.mulf %104, %105 : vector<8x128xf32>
    %107 = arith.addf %100, %106 : vector<8x128xf32>
    %c240_i32_14 = arith.constant 240 : i32
    %108 = tpu.dynamic_rotate %1 by %c240_i32_14 dim 1 : vector<8x256xf32>, i32 -> vector<8x256xf32>
    %109 = vector.extract_strided_slice %108 {offsets = [0, 0], sizes = [8, 128], strides = [1, 1]} : vector<8x256xf32> to vector<8x128xf32>
    %110 = vector.extract_strided_slice %83 {offsets = [32, 0], sizes = [8, 128], strides = [1, 1]} : vector<72x128xf32> to vector<8x128xf32>
    %111 = arith.mulf %109, %110 : vector<8x128xf32>
    %112 = arith.addf %107, %111 : vector<8x128xf32>
    %c239_i32_15 = arith.constant 239 : i32
    %113 = tpu.dynamic_rotate %1 by %c239_i32_15 dim 1 : vector<8x256xf32>, i32 -> vector<8x256xf32>
    %114 = vector.extract_strided_slice %113 {offsets = [0, 0], sizes = [8, 128], strides = [1, 1]} : vector<8x256xf32> to vector<8x128xf32>
    %115 = vector.broadcast %13 : vector<1x128xf32> to vector<8x128xf32>
    %116 = arith.mulf %114, %115 : vector<8x128xf32>
    %117 = vector.extract_strided_slice %83 {offsets = [40, 0], sizes = [8, 128], strides = [1, 1]} : vector<72x128xf32> to vector<8x128xf32>
    %118 = arith.mulf %116, %117 : vector<8x128xf32>
    %119 = arith.addf %112, %118 : vector<8x128xf32>
    %c225_i32_16 = arith.constant 225 : i32
    %120 = tpu.dynamic_rotate %1 by %c225_i32_16 dim 1 : vector<8x256xf32>, i32 -> vector<8x256xf32>
    %121 = vector.extract_strided_slice %120 {offsets = [0, 0], sizes = [8, 128], strides = [1, 1]} : vector<8x256xf32> to vector<8x128xf32>
    %122 = vector.broadcast %9 : vector<1x128xf32> to vector<8x128xf32>
    %123 = arith.mulf %121, %122 : vector<8x128xf32>
    %124 = vector.extract_strided_slice %83 {offsets = [48, 0], sizes = [8, 128], strides = [1, 1]} : vector<72x128xf32> to vector<8x128xf32>
    %125 = arith.mulf %123, %124 : vector<8x128xf32>
    %126 = arith.addf %119, %125 : vector<8x128xf32>
    %c224_i32_17 = arith.constant 224 : i32
    %127 = tpu.dynamic_rotate %1 by %c224_i32_17 dim 1 : vector<8x256xf32>, i32 -> vector<8x256xf32>
    %128 = vector.extract_strided_slice %127 {offsets = [0, 0], sizes = [8, 128], strides = [1, 1]} : vector<8x256xf32> to vector<8x128xf32>
    %129 = vector.extract_strided_slice %83 {offsets = [56, 0], sizes = [8, 128], strides = [1, 1]} : vector<72x128xf32> to vector<8x128xf32>
    %130 = arith.mulf %128, %129 : vector<8x128xf32>
    %131 = arith.addf %126, %130 : vector<8x128xf32>
    %c223_i32_18 = arith.constant 223 : i32
    %132 = tpu.dynamic_rotate %1 by %c223_i32_18 dim 1 : vector<8x256xf32>, i32 -> vector<8x256xf32>
    %133 = vector.extract_strided_slice %132 {offsets = [0, 0], sizes = [8, 128], strides = [1, 1]} : vector<8x256xf32> to vector<8x128xf32>
    %134 = vector.broadcast %13 : vector<1x128xf32> to vector<8x128xf32>
    %135 = arith.mulf %133, %134 : vector<8x128xf32>
    %136 = vector.extract_strided_slice %83 {offsets = [64, 0], sizes = [8, 128], strides = [1, 1]} : vector<72x128xf32> to vector<8x128xf32>
    %137 = arith.mulf %135, %136 : vector<8x128xf32>
    %138 = arith.addf %131, %137 : vector<8x128xf32>
    %c0_19 = arith.constant 0 : index
    %c0_20 = arith.constant 0 : index
    %c0_21 = arith.constant 0 : index
    %139 = vector.load %arg6[%c0_19, %c0_20, %c0_21] : memref<1x8x128xf32, #tpu.memory_space<vmem>>, vector<1x8x128xf32>
    %140 = vector.shape_cast %139 : vector<1x8x128xf32> to vector<8x128xf32>
    %141 = vector.shape_cast %138 : vector<8x128xf32> to vector<1x8x128xf32>
    tpu.vector_store %arg6[%c0_19, %c0_20, %c0_21], %141 {strides = array<i32>} : memref<1x8x128xf32, #tpu.memory_space<vmem>>, vector<1x8x128xf32>,
    return
  }
  func.func @transform_0(%arg0: i32, %arg1: i32) -> (i32, i32, i32, i32) {
    %c0_i32 = arith.constant 0 : i32
    %c0_i32_0 = arith.constant 0 : i32
    %c0_i32_1 = arith.constant 0 : i32
    return %arg0, %arg1, %c0_i32, %c0_i32_0 : i32, i32, i32, i32
  }
  func.func @transform_1(%arg0: i32, %arg1: i32) -> (i32, i32) {
    %c0_i32 = arith.constant 0 : i32
    %c0_i32_0 = arith.constant 0 : i32
    %c0_i32_1 = arith.constant 0 : i32
    return %c0_i32, %c0_i32_0 : i32, i32
  }
  func.func @transform_2(%arg0: i32, %arg1: i32) -> (i32, i32) {
    %c0_i32 = arith.constant 0 : i32
    %c0_i32_0 = arith.constant 0 : i32
    %c0_i32_1 = arith.constant 0 : i32
    return %c0_i32, %c0_i32_0 : i32, i32
  }
  func.func @transform_3(%arg0: i32, %arg1: i32) -> (i32, i32, i32) {
    %c0_i32 = arith.constant 0 : i32
    %c0_i32_0 = arith.constant 0 : i32
    %c0_i32_1 = arith.constant 0 : i32
    return %arg0, %c0_i32, %c0_i32_0 : i32, i32, i32
  }
  func.func @transform_4(%arg0: i32, %arg1: i32) -> (i32, i32, i32) {
    %c0_i32 = arith.constant 0 : i32
    %c0_i32_0 = arith.constant 0 : i32
    return %arg0, %c0_i32, %arg1 : i32, i32, i32
  }
}

</mosaic_0001>

<llo_original>
// kernel: squeeze.6
$region0: #{squeeze.6}
  %s0 = inlined_call_operand.vmem [shape: f32[72,8], index: 0, kind: input, shape index: {}]
  %s1 = inlined_call_operand.vmem [shape: f32[8,9,8], index: 1, kind: output, shape index: {}]
  %v2 = vld [vmem:[%s0] sm:$0xff]
  %vm3 = vcmask 72704
  %4 = vst.msk [vmem:[%s1] ss:$8 sm:$0xf] %vm3, %v2
  %5 = vst.msk [vmem:[%s1] ss:$8 sm:$0xf0] %vm3, %v2
  %v6 = vld [vmem:[%s0] sm:$0xff]
  %7 = vrot.lane.b32.xlu0 %v6, 119
  %v8 = vpop.permute.xlu0 %7
  %vm9 = vcmask 72704
  %s10 = scalar_lea.vmem %s1, 1
  %11 = vst.msk [vmem:[%s10] ss:$8 sm:$0xf] %vm9, %v8
  %s12 = scalar_lea.vmem %s1, 1
  %13 = vst.msk [vmem:[%s12] ss:$8 sm:$0xf0] %vm9, %v8
  %v14 = vld [vmem:[%s0] sm:$0xff]
  %15 = vrot.lane.b32.xlu0 %v14, 110
  %v16 = vpop.permute.xlu0 %15
  %vm17 = vcmask 72704
  %s18 = scalar_lea.vmem %s1, 2
  %19 = vst.msk [vmem:[%s18] ss:$8 sm:$0xf] %vm17, %v16
  %s20 = scalar_lea.vmem %s1, 2
  %21 = vst.msk [vmem:[%s20] ss:$8 sm:$0xf0] %vm17, %v16
  %v22 = vld [vmem:[%s0] sm:$0xff]
  %23 = vrot.lane.b32.xlu0 %v22, 101
  %v24 = vpop.permute.xlu0 %23
  %vm25 = vcmask 72704
  %s26 = scalar_lea.vmem %s1, 3
  %27 = vst.msk [vmem:[%s26] ss:$8 sm:$0xf] %vm25, %v24
  %s28 = scalar_lea.vmem %s1, 3
  %29 = vst.msk [vmem:[%s28] ss:$8 sm:$0xf0] %vm25, %v24
  %v30 = vld [vmem:[%s0] sm:$0xff]
  %31 = vrot.lane.b32.xlu0 %v30, 92
  %v32 = vpop.permute.xlu0 %31
  %vm33 = vcmask 72704
  %s34 = scalar_lea.vmem %s1, 4
  %35 = vst.msk [vmem:[%s34] ss:$8 sm:$0xf] %vm33, %v32
  %s36 = scalar_lea.vmem %s1, 4
  %37 = vst.msk [vmem:[%s36] ss:$8 sm:$0xf0] %vm33, %v32
  %v38 = vld [vmem:[%s0] sm:$0xff]
  %39 = vrot.lane.b32.xlu0 %v38, 83
  %v40 = vpop.permute.xlu0 %39
  %vm41 = vcmask 72704
  %s42 = scalar_lea.vmem %s1, 5
  %43 = vst.msk [vmem:[%s42] ss:$8 sm:$0xf] %vm41, %v40
  %s44 = scalar_lea.vmem %s1, 5
  %45 = vst.msk [vmem:[%s44] ss:$8 sm:$0xf0] %vm41, %v40
  %v46 = vld [vmem:[%s0] sm:$0xff]
  %47 = vrot.lane.b32.xlu0 %v46, 74
  %v48 = vpop.permute.xlu0 %47
  %vm49 = vcmask 72704
  %s50 = scalar_lea.vmem %s1, 6
  %51 = vst.msk [vmem:[%s50] ss:$8 sm:$0xf] %vm49, %v48
  %s52 = scalar_lea.vmem %s1, 6
  %53 = vst.msk [vmem:[%s52] ss:$8 sm:$0xf0] %vm49, %v48
  %v54 = vld [vmem:[%s0] sm:$0xff]
  %55 = vrot.lane.b32.xlu0 %v54, 65
  %v56 = vpop.permute.xlu0 %55
  %vm57 = vcmask 72704
  %s58 = scalar_lea.vmem %s1, 7
  %59 = vst.msk [vmem:[%s58] ss:$8 sm:$0xf] %vm57, %v56
  %s60 = scalar_lea.vmem %s1, 7
  %61 = vst.msk [vmem:[%s60] ss:$8 sm:$0xf0] %vm57, %v56

// kernel: dyconv_pallas.1
$region0: #{dyconv_pallas.1}
  #allocation0 [shape = 'u32[]', space=smem, size = 0x4, offset = 0x4, fixed_abs, tag = 'smem constant byte address 0x4 - core index']
  #allocation1 [shape = 'u32[72,128]{1,0:T(1,128)}', space=vmem, size = 0x9000, scoped, tag = 'internal scratch']
  %s0 = inlined_call_operand.vmem [shape: f32[2,2,8,256], index: 0, kind: input, shape index: {}]
  %s1 = inlined_call_operand.vmem [shape: f32[8,9], index: 1, kind: input, shape index: {}]
  %s2 = inlined_call_operand.vmem [shape: f32[72,8], index: 2, kind: input, shape index: {}]
  %s3 = inlined_call_operand.vmem [shape: f32[2,72,1], index: 3, kind: input, shape index: {}]
  %s4 = inlined_call_operand.vmem [shape: f32[2,8,256], index: 4, kind: output, shape index: {}]
  %s5 = sld [smem:[#allocation0]]
  $region49: #{dyconv_pallas.1} parent=0
    _
  %s7 = ssub.s32 1, %s5
  %s8 = scalar_select 0, %s7, %s5
  loop: start=0, step=1, limit=6
  $region2: #{dyconv_pallas.1} parent=0 // loop_pre_header
    _
  $region3: #{dyconv_pallas.1} parent=0 // loop_header
    %s10 = sphi 0, %s14
    %p11 = scmp.ge.s32.totalorder %s10, 6
    %s17 = sphi 0, %s29
    %s18 = sphi 0, %s25
    %s19 = sphi 0, %s17
    %s20 = sphi 0, %s18
    %s21 = sphi 0, %s19
    %s22 = sphi 0, %s20
    %s34 = sphi 0, %s36
    %s37 = sphi 0, %s34
    %s38 = sphi 0, %s37
    %s54 = sphi 0, %s38
    %s58 = sphi 0, %s58
    %s60 = sphi 0, %s58
    %s61 = sphi 0, %s60
    %s75 = sphi 0, %s61
    %s79 = sphi 0, %s79
    %s81 = sphi 0, %s79
    %s82 = sphi 0, %s81
    %s96 = sphi 0, %s82
    %s102 = sphi 0, %s104
    %s105 = sphi 0, %s102
    %s106 = sphi 0, %s105
    %s122 = sphi 0, %s106
    %s130 = sphi 0, %s132
    %s133 = sphi 0, %s130
    %s134 = sphi 0, %s133
    %s150 = sphi 0, %s134
  $region4: #{dyconv_pallas.1} parent=0 // loop_header_branch
    %13 = sbr.rel (%p11) target = $region8
  $region5: #{dyconv_pallas.1} parent=0 // loop_body
    %s15 = ssub.s32 %s10, 1
    %s16 = ssub.s32 %s10, 2
    %s23 = sadd.s32 1, %s18
    %p24 = scmp.ge.s32.totalorder %s23, 2
    %s25 = scalar_select %p24, 0, %s23
    %s26 = sadd.s32 1, %s17
    %s27 = scalar_select %p24, %s26, %s17
    %p28 = scmp.ge.s32.totalorder %s27, 2
    %s29 = scalar_select %p28, 0, %s27
    %s30 = ssub.s32 %s17, %s29
    %s31 = ssub.s32 %s18, %s25
    %s32 = sor.u32 %s30, %s31
    %p33 = scmp.eq.s32.totalorder %s32, 0
    %s35 = sadd.s32 %s34, 1
    %s36 = scalar_select %p33, %s34, %s35
    %p39 = pneg %p33
    %p40 = scmp.eq.s32.totalorder %s10, 3
    %p41 = por %p39, %p40
    %p42 = scmp.ne.s32.totalorder %s34, %s37
    %p43 = scmp.eq.s32.totalorder %s10, 0
    %p44 = por %p42, %p43
    %p45 = scmp.ne.s32.totalorder %s34, %s37
    %p46 = scmp.eq.s32.totalorder %s15, 3
    %p47 = por %p45, %p46
    %p48 = scmp.ne.s32.totalorder %s37, %s38
    %p49 = scmp.eq.s32.totalorder %s15, 0
    %p50 = por %p48, %p49
    %p51 = scmp.ne.s32.totalorder %s37, %s38
    %p52 = scmp.eq.s32.totalorder %s16, 3
    %p53 = por %p51, %p52
    %p55 = scmp.ne.s32.totalorder %s38, %s54
    %p56 = scmp.eq.s32.totalorder %s16, 0
    %p57 = por %p55, %p56
    %s59 = sadd.s32 %s58, 1
    %p62 = scmp.eq.s32.totalorder %s10, 3
    %p63 = scmp.ne.s32.totalorder %s58, %s60
    %p64 = scmp.eq.s32.totalorder %s10, 0
    %p65 = por %p63, %p64
    %p66 = scmp.ne.s32.totalorder %s58, %s60
    %p67 = scmp.eq.s32.totalorder %s15, 3
    %p68 = por %p66, %p67
    %p69 = scmp.ne.s32.totalorder %s60, %s61
    %p70 = scmp.eq.s32.totalorder %s15, 0
    %p71 = por %p69, %p70
    %p72 = scmp.ne.s32.totalorder %s60, %s61
    %p73 = scmp.eq.s32.totalorder %s16, 3
    %p74 = por %p72, %p73
    %p76 = scmp.ne.s32.totalorder %s61, %s75
    %p77 = scmp.eq.s32.totalorder %s16, 0
    %p78 = por %p76, %p77
    %s80 = sadd.s32 %s79, 1
    %p83 = scmp.eq.s32.totalorder %s10, 3
    %p84 = scmp.ne.s32.totalorder %s79, %s81
    %p85 = scmp.eq.s32.totalorder %s10, 0
    %p86 = por %p84, %p85
    %p87 = scmp.ne.s32.totalorder %s79, %s81
    %p88 = scmp.eq.s32.totalorder %s15, 3
    %p89 = por %p87, %p88
    %p90 = scmp.ne.s32.totalorder %s81, %s82
    %p91 = scmp.eq.s32.totalorder %s15, 0
    %p92 = por %p90, %p91
    %p93 = scmp.ne.s32.totalorder %s81, %s82
    %p94 = scmp.eq.s32.totalorder %s16, 3
    %p95 = por %p93, %p94
    %p97 = scmp.ne.s32.totalorder %s82, %s96
    %p98 = scmp.eq.s32.totalorder %s16, 0
    %p99 = por %p97, %p98
    %s100 = ssub.s32 %s17, %s29
    %p101 = scmp.eq.s32.totalorder %s100, 0
    %s103 = sadd.s32 %s102, 1
    %s104 = scalar_select %p101, %s102, %s103
    %p107 = pneg %p101
    %p108 = scmp.eq.s32.totalorder %s10, 3
    %p109 = por %p107, %p108
    %p110 = scmp.ne.s32.totalorder %s102, %s105
    %p111 = scmp.eq.s32.totalorder %s10, 0
    %p112 = por %p110, %p111
    %p113 = scmp.ne.s32.totalorder %s102, %s105
    %p114 = scmp.eq.s32.totalorder %s15, 3
    %p115 = por %p113, %p114
    %p116 = scmp.ne.s32.totalorder %s105, %s106
    %p117 = scmp.eq.s32.totalorder %s15, 0
    %p118 = por %p116, %p117
    %p119 = scmp.ne.s32.totalorder %s105, %s106
    %p120 = scmp.eq.s32.totalorder %s16, 3
    %p121 = por %p119, %p120
    %p123 = scmp.ne.s32.totalorder %s106, %s122
    %p124 = scmp.eq.s32.totalorder %s16, 0
    %p125 = por %p123, %p124
    %s126 = ssub.s32 %s17, %s29
    %s127 = ssub.s32 %s18, %s25
    %s128 = sor.u32 %s126, %s127
    %p129 = scmp.eq.s32.totalorder %s128, 0
    %s131 = sadd.s32 %s130, 1
    %s132 = scalar_select %p129, %s130, %s131
    %p135 = pneg %p129
    %p136 = scmp.eq.s32.totalorder %s10, 3
    %p137 = por %p135, %p136
    %p138 = scmp.ne.s32.totalorder %s130, %s133
    %p139 = scmp.eq.s32.totalorder %s10, 0
    %p140 = por %p138, %p139
    %p141 = scmp.ne.s32.totalorder %s130, %s133
    %p142 = scmp.eq.s32.totalorder %s15, 3
    %p143 = por %p141, %p142
    %p144 = scmp.ne.s32.totalorder %s133, %s134
    %p145 = scmp.eq.s32.totalorder %s15, 0
    %p146 = por %p144, %p145
    %p147 = scmp.ne.s32.totalorder %s133, %s134
    %p148 = scmp.eq.s32.totalorder %s16, 3
    %p149 = por %p147, %p148
    %p151 = scmp.ne.s32.totalorder %s134, %s150
    %p152 = scmp.eq.s32.totalorder %s16, 0
    %p153 = por %p151, %p152
    %p154 = scmp.le.s32.totalorder 1, %s10
    %p155 = scmp.lt.s32.totalorder %s10, 5
    %p156 = pnand %p154, %p155
    %p157 = pneg %p156
    // Predicated region
    $region9: #{dyconv_pallas.1} parent=5 // pred_check
      _
    $region10: #{dyconv_pallas.1} parent=5 // pred_check_branch
      %159 = sbr.rel (%p156) target = $region12
    $region11: #{dyconv_pallas.1} parent=5 // pred_region
      %s160 = ssub.s32 %s10, 1
      // Predicated region
      $region13: #{dyconv_pallas.1} parent=11 // pred_check
        %p161 = pneg %p71
      $region14: #{dyconv_pallas.1} parent=11 // pred_check_branch
        %163 = sbr.rel (%p161) target = $region16
      $region15: #{dyconv_pallas.1} parent=11 // pred_region
        _
      $region16: #{dyconv_pallas.1} parent=11 // pred_fallthru
        _
      // Predicated region
      $region17: #{dyconv_pallas.1} parent=11 // pred_check
        %p164 = pneg %p92
      $region18: #{dyconv_pallas.1} parent=11 // pred_check_branch
        %166 = sbr.rel (%p164) target = $region20
      $region19: #{dyconv_pallas.1} parent=11 // pred_region
        _
      $region20: #{dyconv_pallas.1} parent=11 // pred_fallthru
        _
    $region12: #{dyconv_pallas.1} parent=5 // pred_fallthru
      _
    %p167 = scmp.lt.s32.totalorder %s10, 4
    // Predicated region
    $region21: #{dyconv_pallas.1} parent=5 // pred_check
      %p168 = pneg %p167
    $region22: #{dyconv_pallas.1} parent=5 // pred_check_branch
      %170 = sbr.rel (%p168) target = $region24
    $region23: #{dyconv_pallas.1} parent=5 // pred_region
      // Predicated region
      $region25: #{dyconv_pallas.1} parent=23 // pred_check
        %p171 = pneg %p44
      $region26: #{dyconv_pallas.1} parent=23 // pred_check_branch
        %173 = sbr.rel (%p171) target = $region28
      $region27: #{dyconv_pallas.1} parent=23 // pred_region
        %p174 = scmp.lt.s32.totalorder %s17, 1
        %s175 = scalar_select %p174, %s17, 1
        %p176 = scmp.lt.s32.totalorder %s18, 1
        %s177 = scalar_select %p176, %s18, 1
        %s178 = smul.addr %s177, 2
        %s179 = smul.addr %s175, 4
        %s180 = sadd.s32 %s178, %s179
        %s181 = smul.addr %s180, 8
        %s182 = scalar_lea.vmem %s0, %s181
      $region28: #{dyconv_pallas.1} parent=23 // pred_fallthru
        _
      // Predicated region
      $region29: #{dyconv_pallas.1} parent=23 // pred_check
        %p183 = pneg %p112
      $region30: #{dyconv_pallas.1} parent=23 // pred_check_branch
        %185 = sbr.rel (%p183) target = $region32
      $region31: #{dyconv_pallas.1} parent=23 // pred_region
        %p186 = scmp.lt.s32.totalorder %s17, 1
        %s187 = scalar_select %p186, %s17, 1
        %s188 = smul.addr %s187, 9
        %s189 = smul.addr %s188, 8
        %s190 = scalar_lea.vmem %s3, %s189
      $region32: #{dyconv_pallas.1} parent=23 // pred_fallthru
        _
    $region24: #{dyconv_pallas.1} parent=5 // pred_fallthru
      _
    %p191 = scmp.le.s32.totalorder 1, %s10
    %p192 = scmp.lt.s32.totalorder %s10, 5
    %p193 = pnand %p191, %p192
    %p194 = pneg %p193
    // Predicated region
    $region33: #{dyconv_pallas.1} parent=5 // pred_check
      _
    $region34: #{dyconv_pallas.1} parent=5 // pred_check_branch
      %196 = sbr.rel (%p193) target = $region36
    $region35: #{dyconv_pallas.1} parent=5 // pred_region
      %s197 = ssub.s32 %s10, 1
      %p198 = scmp.lt.s32.totalorder %s19, 1
      %s199 = scalar_select %p198, %s19, 1
      %p200 = scmp.lt.s32.totalorder %s20, 1
      %s201 = scalar_select %p200, %s20, 1
      %s202 = smul.addr %s201, 2
      %s203 = smul.addr %s199, 4
      %s204 = sadd.s32 %s202, %s203
      %s205 = smul.addr %s204, 8
      %s206 = scalar_lea.vmem %s0, %s205
      %p207 = pneg %p50
      %p208 = pneg %p47
      %p209 = pneg %p71
      %p210 = pneg %p68
      %p211 = pneg %p92
      %p212 = pneg %p89
      %p213 = scmp.lt.s32.totalorder %s19, 1
      %s214 = scalar_select %p213, %s19, 1
      %s215 = smul.addr %s214, 9
      %s216 = smul.addr %s215, 8
      %s217 = scalar_lea.vmem %s3, %s216
      %p218 = pneg %p118
      %p219 = pneg %p115
      %p220 = pneg %p146
      %p221 = pneg %p143
      %p222 = scmp.lt.s32.totalorder %s19, 1
      %s223 = scalar_select %p222, %s19, 1
      %p224 = scmp.lt.s32.totalorder %s20, 1
      %s225 = scalar_select %p224, %s20, 1
      %s226 = smul.addr %s223, 2
      %s227 = sadd.s32 %s225, %s226
      %s228 = smul.addr %s227, 8
      %s229 = scalar_lea.vmem %s4, %s228
      %p230 = scmp.lt.s32.totalorder %s19, 1
      %s231 = scalar_select %p230, %s19, 1
      %p232 = scmp.lt.s32.totalorder %s20, 1
      %s233 = scalar_select %p232, %s20, 1
      %s234 = smul.addr %s233, 2
      %s235 = smul.addr %s231, 4
      %s236 = sadd.s32 %s234, %s235
      %s237 = smul.addr %s236, 8
      %s238 = scalar_lea.vmem %s0, %s237
      %p239 = scmp.lt.s32.totalorder %s19, 1
      %s240 = scalar_select %p239, %s19, 1
      %s241 = smul.addr %s240, 9
      %s242 = smul.addr %s241, 8
      %s243 = scalar_lea.vmem %s3, %s242
      %p244 = scmp.lt.s32.totalorder %s19, 1
      %s245 = scalar_select %p244, %s19, 1
      %p246 = scmp.lt.s32.totalorder %s20, 1
      %s247 = scalar_select %p246, %s20, 1
      %s248 = smul.addr %s245, 2
      %s249 = sadd.s32 %s247, %s248
      %s250 = smul.addr %s249, 8
      %s251 = scalar_lea.vmem %s4, %s250
      %v252 = vld [vmem:[%s238] sm:$0xff]
      %v253 = vld [vmem:[%s238 + $0x8] sm:$0xff]
      %v254 = vld [vmem:[%s1] sm:$0xff]
      %v255 = vlaneseq
      %v256 = vand.u32 %v255, 127
      %v257 = vand.u32 %v256, 15
      %vm258 = vcmp.ge.s32.totalorder %v257, 1
      %v259 = vsel %vm258, 1, 0
      %v260 = vcvt.s32.f32 %v259
      %vm261 = vcmp.le.s32.totalorder %v257, 14
      %v262 = vsel %vm261, 1, 0
      %v263 = vcvt.s32.f32 %v262
      %264 = vrot.lane.b32.xlu0 %v252, 1
      %v265 = vpop.permute.xlu0 %264
      %266 = vrot.lane.b32.xlu0 %v253, 1
      %v267 = vpop.permute.xlu0 %266
      %vm268 = vcmp.lt.s32.totalorder %v256, 1
      %v269 = vsel %vm268, %v267, %v265
      %v270 = vmul.f32 %v269, %v260
      %272 = vset.pattern.permute.xlu0 0
      %273 = vperm.xlu0 %272, %v254
      %v274 = vpop.permute.xlu0 %273
      %v276 = vmul.f32 %v274, %v270
      %277 = vset.pattern.permute.xlu0 1
      %278 = vperm.xlu0 %277, %v254
      %v279 = vpop.permute.xlu0 %278
      %v281 = vmul.f32 %v279, %v252
      %v282 = vadd.f32 %v276, %v281
      %283 = vrot.lane.b32.xlu0 %v252, 127
      %v284 = vpop.permute.xlu0 %283
      %285 = vrot.lane.b32.xlu0 %v253, 127
      %v286 = vpop.permute.xlu0 %285
      %vm287 = vcmp.lt.s32.totalorder %v256, 127
      %v288 = vsel %vm287, %v284, %v286
      %v289 = vmul.f32 %v288, %v263
      %290 = vset.pattern.permute.xlu0 2
      %291 = vperm.xlu0 %290, %v254
      %v292 = vpop.permute.xlu0 %291
      %v294 = vmul.f32 %v292, %v289
      %v295 = vadd.f32 %v282, %v294
      %296 = vrot.lane.b32.xlu0 %v252, 113
      %v297 = vpop.permute.xlu0 %296
      %298 = vrot.lane.b32.xlu0 %v253, 113
      %v299 = vpop.permute.xlu0 %298
      %vm300 = vcmp.lt.s32.totalorder %v256, 113
      %v301 = vsel %vm300, %v297, %v299
      %v302 = vmul.f32 %v301, %v260
      %303 = vset.pattern.permute.xlu0 3
      %304 = vperm.xlu0 %303, %v254
      %v305 = vpop.permute.xlu0 %304
      %v307 = vmul.f32 %v305, %v302
      %v308 = vadd.f32 %v295, %v307
      %309 = vrot.lane.b32.xlu0 %v252, 112
      %v310 = vpop.permute.xlu0 %309
      %311 = vrot.lane.b32.xlu0 %v253, 112
      %v312 = vpop.permute.xlu0 %311
      %vm313 = vcmp.lt.s32.totalorder %v256, 112
      %v314 = vsel %vm313, %v310, %v312
      %315 = vset.pattern.permute.xlu0 4
      %316 = vperm.xlu0 %315, %v254
      %v317 = vpop.permute.xlu0 %316
      %v319 = vmul.f32 %v317, %v314
      %v320 = vadd.f32 %v308, %v319
      %321 = vrot.lane.b32.xlu0 %v252, 111
      %v322 = vpop.permute.xlu0 %321
      %323 = vrot.lane.b32.xlu0 %v253, 111
      %v324 = vpop.permute.xlu0 %323
      %vm325 = vcmp.lt.s32.totalorder %v256, 111
      %v326 = vsel %vm325, %v322, %v324
      %v327 = vmul.f32 %v326, %v263
      %328 = vset.pattern.permute.xlu0 5
      %329 = vperm.xlu0 %328, %v254
      %v330 = vpop.permute.xlu0 %329
      %v332 = vmul.f32 %v330, %v327
      %v333 = vadd.f32 %v320, %v332
      %334 = vrot.lane.b32.xlu0 %v252, 97
      %v335 = vpop.permute.xlu0 %334
      %336 = vrot.lane.b32.xlu0 %v253, 97
      %v337 = vpop.permute.xlu0 %336
      %vm338 = vcmp.lt.s32.totalorder %v256, 97
      %v339 = vsel %vm338, %v335, %v337
      %v340 = vmul.f32 %v339, %v260
      %341 = vset.pattern.permute.xlu0 6
      %342 = vperm.xlu0 %341, %v254
      %v343 = vpop.permute.xlu0 %342
      %v345 = vmul.f32 %v343, %v340
      %v346 = vadd.f32 %v333, %v345
      %347 = vrot.lane.b32.xlu0 %v252, 96
      %v348 = vpop.permute.xlu0 %347
      %349 = vrot.lane.b32.xlu0 %v253, 96
      %v350 = vpop.permute.xlu0 %349
      %vm351 = vcmp.lt.s32.totalorder %v256, 96
      %v352 = vsel %vm351, %v348, %v350
      %353 = vset.pattern.permute.xlu0 7
      %354 = vperm.xlu0 %353, %v254
      %v355 = vpop.permute.xlu0 %354
      %v357 = vmul.f32 %v355, %v352
      %v358 = vadd.f32 %v346, %v357
      %359 = vrot.lane.b32.xlu0 %v252, 95
      %v360 = vpop.permute.xlu0 %359
      %361 = vrot.lane.b32.xlu0 %v253, 95
      %v362 = vpop.permute.xlu0 %361
      %vm363 = vcmp.lt.s32.totalorder %v256, 95
      %v364 = vsel %vm363, %v360, %v362
      %v365 = vmul.f32 %v364, %v263
      %366 = vset.pattern.permute.xlu0 8
      %367 = vperm.xlu0 %366, %v254
      %v368 = vpop.permute.xlu0 %367
      %v370 = vmul.f32 %v368, %v365
      %v371 = vadd.f32 %v358, %v370
      %v372 = vld [vmem:[%s2] sm:$0xff]
      %v373 = vld [vmem:[%s2 + $0x8] sm:$0xff]
      %v374 = vld [vmem:[%s2 + $0x10] sm:$0xff]
      %v375 = vld [vmem:[%s2 + $0x18] sm:$0xff]
      %v376 = vld [vmem:[%s2 + $0x20] sm:$0xff]
      %v377 = vld [vmem:[%s2 + $0x28] sm:$0xff]
      %v378 = vld [vmem:[%s2 + $0x30] sm:$0xff]
      %v379 = vld [vmem:[%s2 + $0x38] sm:$0xff]
      %v380 = vld [vmem:[%s2 + $0x40] sm:$0xff]
      %v381 = vld [vmem:[%s243] sm:$0xff]
      %v382 = vld [vmem:[%s243 + $0x8] sm:$0xff]
      %v383 = vld [vmem:[%s243 + $0x10] sm:$0xff]
      %v384 = vld [vmem:[%s243 + $0x18] sm:$0xff]
      %v385 = vld [vmem:[%s243 + $0x20] sm:$0xff]
      %v386 = vld [vmem:[%s243 + $0x28] sm:$0xff]
      %v387 = vld [vmem:[%s243 + $0x30] sm:$0xff]
      %v388 = vld [vmem:[%s243 + $0x38] sm:$0xff]
      %v389 = vld [vmem:[%s243 + $0x40] sm:$0xff]
      %391 = vset.pattern.permute.xlu0 0
      %392 = vperm.xlu0 %391, %v381
      %v393 = vpop.permute.xlu0 %392
      %396 = vset.pattern.permute.xlu0 0
      %397 = vperm.xlu0 %396, %v382
      %v398 = vpop.permute.xlu0 %397
      %401 = vset.pattern.permute.xlu0 0
      %402 = vperm.xlu0 %401, %v383
      %v403 = vpop.permute.xlu0 %402
      %406 = vset.pattern.permute.xlu0 0
      %407 = vperm.xlu0 %406, %v384
      %v408 = vpop.permute.xlu0 %407
      %411 = vset.pattern.permute.xlu0 0
      %412 = vperm.xlu0 %411, %v385
      %v413 = vpop.permute.xlu0 %412
      %416 = vset.pattern.permute.xlu0 0
      %417 = vperm.xlu0 %416, %v386
      %v418 = vpop.permute.xlu0 %417
      %421 = vset.pattern.permute.xlu0 0
      %422 = vperm.xlu0 %421, %v387
      %v423 = vpop.permute.xlu0 %422
      %426 = vset.pattern.permute.xlu0 0
      %427 = vperm.xlu0 %426, %v388
      %v428 = vpop.permute.xlu0 %427
      %431 = vset.pattern.permute.xlu0 0
      %432 = vperm.xlu0 %431, %v389
      %v433 = vpop.permute.xlu0 %432
      %vm435 = vcmask 64512
      %v437 = vsel %vm435, %v372, 0
      %v440 = vsel %vm435, %v373, 0
      %v443 = vsel %vm435, %v374, 0
      %v446 = vsel %vm435, %v375, 0
      %v449 = vsel %vm435, %v376, 0
      %v452 = vsel %vm435, %v377, 0
      %v455 = vsel %vm435, %v378, 0
      %v458 = vsel %vm435, %v379, 0
      %v461 = vsel %vm435, %v380, 0
      %463 = vmatpush.msra.mxu0 0.0
      %464 = vmatpush.msra.mxu0 0.0
      %465 = vmatpush.msra.mxu0 0.0
      %466 = vmatpush.msra.mxu0 0.0
      %467 = vmatpush.msra.mxu0 0.0
      %468 = vmatpush.msra.mxu0 0.0
      %469 = vmatpush.msra.mxu0 0.0
      %470 = vmatpush.msra.mxu0 0.0
      %471 = vmatpush.msra.mxu0 0.0
      %472 = vmatpush.msra.mxu0 0.0
      %473 = vmatpush.msra.mxu0 0.0
      %474 = vmatpush.msra.mxu0 0.0
      %475 = vmatpush.msra.mxu0 0.0
      %476 = vmatpush.msra.mxu0 0.0
      %477 = vmatpush.msra.mxu0 0.0
      %478 = vmatpush.msra.mxu0 %v371
      %479 = vmatmul.f32.gmra.mxu0 %v437
      %v480 = vpop.f32.mrf.mxu0
      %v481 = vadd.f32 %v393, %v480
      %482 = vmatmul.f32.gmra.mxu0 %v440
      %v483 = vpop.f32.mrf.mxu0
      %v484 = vadd.f32 %v398, %v483
      %485 = vmatmul.f32.gmra.mxu0 %v443
      %v486 = vpop.f32.mrf.mxu0
      %v487 = vadd.f32 %v403, %v486
      %488 = vmatmul.f32.gmra.mxu0 %v446
      %v489 = vpop.f32.mrf.mxu0
      %v490 = vadd.f32 %v408, %v489
      %491 = vmatmul.f32.gmra.mxu0 %v449
      %v492 = vpop.f32.mrf.mxu0
      %v493 = vadd.f32 %v413, %v492
      %494 = vmatmul.f32.gmra.mxu0 %v452
      %v495 = vpop.f32.mrf.mxu0
      %v496 = vadd.f32 %v418, %v495
      %497 = vmatmul.f32.gmra.mxu0 %v455
      %v498 = vpop.f32.mrf.mxu0
      %v499 = vadd.f32 %v423, %v498
      %500 = vmatmul.f32.gmra.mxu0 %v458
      %v501 = vpop.f32.mrf.mxu0
      %v502 = vadd.f32 %v428, %v501
      %503 = vmatmul.f32.gmra.mxu0 %v461
      %v504 = vpop.f32.mrf.mxu0
      %v505 = vadd.f32 %v433, %v504
      %506 = vdwg.mxu0
      %v507 = vmul.f32 %v270, %v481
      %v508 = vmul.f32 %v252, %v484
      %v509 = vadd.f32 %v507, %v508
      %v510 = vmul.f32 %v289, %v487
      %v511 = vadd.f32 %v509, %v510
      %v512 = vmul.f32 %v302, %v490
      %v513 = vadd.f32 %v511, %v512
      %v514 = vmul.f32 %v314, %v493
      %v515 = vadd.f32 %v513, %v514
      %v516 = vmul.f32 %v327, %v496
      %v517 = vadd.f32 %v515, %v516
      %v518 = vmul.f32 %v340, %v499
      %v519 = vadd.f32 %v517, %v518
      %v520 = vmul.f32 %v352, %v502
      %v521 = vadd.f32 %v519, %v520
      %v522 = vmul.f32 %v365, %v505
      %v523 = vadd.f32 %v521, %v522
      %524 = vst [vmem:[%s251] sm:$0xff] %v523
      %p525 = scmp.lt.s32.totalorder %s19, 1
      %s526 = scalar_select %p525, %s19, 1
      %p527 = scmp.lt.s32.totalorder %s20, 1
      %s528 = scalar_select %p527, %s20, 1
      %s529 = smul.addr %s526, 2
      %s530 = sadd.s32 %s528, %s529
      %s531 = smul.addr %s530, 8
      %s532 = scalar_lea.vmem %s4, %s531
      // Predicated region
      $region37: #{dyconv_pallas.1} parent=35 // pred_check
        %p533 = pneg %p143
      $region38: #{dyconv_pallas.1} parent=35 // pred_check_branch
        %535 = sbr.rel (%p533) target = $region40
      $region39: #{dyconv_pallas.1} parent=35 // pred_region
        _
      $region40: #{dyconv_pallas.1} parent=35 // pred_fallthru
        _
    $region36: #{dyconv_pallas.1} parent=5 // pred_fallthru
      _
    %p536 = scmp.le.s32.totalorder 2, %s10
    // Predicated region
    $region41: #{dyconv_pallas.1} parent=5 // pred_check
      %p537 = pneg %p536
    $region42: #{dyconv_pallas.1} parent=5 // pred_check_branch
      %539 = sbr.rel (%p537) target = $region44
    $region43: #{dyconv_pallas.1} parent=5 // pred_region
      %s540 = ssub.s32 %s10, 2
      // Predicated region
      $region45: #{dyconv_pallas.1} parent=43 // pred_check
        %p541 = pneg %p149
      $region46: #{dyconv_pallas.1} parent=43 // pred_check_branch
        %543 = sbr.rel (%p541) target = $region48
      $region47: #{dyconv_pallas.1} parent=43 // pred_region
        %p544 = scmp.lt.s32.totalorder %s21, 1
        %s545 = scalar_select %p544, %s21, 1
        %p546 = scmp.lt.s32.totalorder %s22, 1
        %s547 = scalar_select %p546, %s22, 1
        %s548 = smul.addr %s545, 2
        %s549 = sadd.s32 %s547, %s548
        %s550 = smul.addr %s549, 8
        %s551 = scalar_lea.vmem %s4, %s550
      $region48: #{dyconv_pallas.1} parent=43 // pred_fallthru
        _
    $region44: #{dyconv_pallas.1} parent=5 // pred_fallthru
      _
  $region6: #{dyconv_pallas.1} parent=0 // loop_footer
    %s14 = sadd.s32 1, %s10
  $region7: #{dyconv_pallas.1} parent=0 // loop_footer_branch
    %9 = sbr.rel target = $region3
  $region8: #{dyconv_pallas.1} parent=0 // loop_exit
    _

</llo_original>
